<compile_context>
chip_gen: v6e
topology: v6e:2x2x1
jax: 0.10.0
libtpu: 0.0.40
codegen_flags: <defaults>
</compile_context>

<pallas_src>
import jax
import jax.numpy as jnp
from jax import lax
from jax.experimental import pallas as pl
from jax.experimental.pallas import tpu as pltpu

G = 128  # outputs packed per lane-dense view row (one full lane group)


def fhat2_kernel(x_ref, w_ref, o_ref):
    # x_ref: (bm, G*T)  lane-dense: lag windows of G consecutive outputs / row
    # w_ref: (G*T, G)   sparse expansion of the masked weight (constant block)
    # o_ref: (bm, G)    lane-dense output tile
    acc = jnp.dot(
        x_ref[...],
        w_ref[...],
        preferred_element_type=jnp.float32,
        precision=lax.Precision.DEFAULT,  # pin single-pass bf16 MXU (v5e roofline)
    )
    o_ref[...] = (1.0 + acc).astype(o_ref.dtype)


def fhat2_forward(x, mask, w_1, *, block_rows=1024):
    """out = 1.0 + squeeze(x @ (mask * w_1), -1);  x: (B, N, T), mask/w_1: (T, 1)."""
    B, N, T = x.shape
    M = B * N
    out_dtype = x.dtype
    itemsize = jnp.dtype(x.dtype).itemsize

    # Effective weight exactly as in forward(): mask * w_1 (mask is 0/1).
    w_vec = (mask * w_1).reshape(T).astype(jnp.float32)

    rows = M // G            # number of full 128-output groups (bulk)
    M_main = rows * G
    tail = M - M_main        # < 128 leftover outputs (jnp epilogue)

    x_flat = x.reshape(M, T)  # free view (contiguous)

    pieces = []

    if rows > 0:
        # Bulk path.  When M % 128 == 0 this reshape is a pure view.
        xv = (x_flat if tail == 0 else x_flat[:M_main]).reshape(rows, G * T)

        # Expansion matrix W[l*T + t, c] = w_vec[t] iff l == c.  Built once,
        # outside the grid loop, in the input dtype (256 KiB for bf16).
        eye = jnp.eye(G, dtype=jnp.float32)
        W = (eye[:, None, :] * w_vec[None, :, None]).reshape(G * T, G).astype(x.dtype)

        # Row-block size: sublane-aligned for the input dtype, capped so the
        # grid has >= 2 steps whenever there is enough work (v7x megacore
        # sharding + pipelining).
        align = 8 if itemsize >= 4 else (16 if itemsize == 2 else 32)
        bm = min(block_rows, rows)
        if bm >= align:
            bm = (bm // align) * align
        if rows >= 2 * align and pl.cdiv(rows, bm) < 2:
            bm = max(align, ((rows // 2) // align) * align)
        grid = (pl.cdiv(rows, bm),)  # partial final block is safe: matmul rows
                                     # are independent and OOB output rows are
                                     # dropped on writeback.

        bulk = pl.pallas_call(
            fhat2_kernel,
            out_shape=jax.ShapeDtypeStruct((rows, G), out_dtype),
            grid=grid,
            in_specs=[
                pl.BlockSpec((bm, G * T), lambda i: (i, 0)),   # x row tiles
                pl.BlockSpec((G * T, G), lambda i: (0, 0)),    # constant: DMA'd once
            ],
            out_specs=pl.BlockSpec((bm, G), lambda i: (i, 0)),
            compiler_params=pltpu.CompilerParams(
                dimension_semantics=("parallel",),
                vmem_limit_bytes=32 * 1024 * 1024,
            ),
            cost_estimate=pl.CostEstimate(
                flops=2 * rows * G * T * G,           # flops the MXU actually runs
                transcendentals=0,
                bytes_accessed=itemsize * (rows * G * T + rows * G + G * T * G),
            ),
        )(xv, W)
        pieces.append(bulk.reshape(rows * G))

    if tail > 0:
        # <128-output tail: trivial jnp epilogue (avoids any full-array pad).
        y_tail = 1.0 + jnp.dot(x_flat[M_main:].astype(jnp.float32), w_vec)
        pieces.append(y_tail.astype(out_dtype))

    out_flat = pieces[0] if len(pieces) == 1 else jnp.concatenate(pieces)
    return out_flat.reshape(B, N)


def init_params(lag, weight_dim, init_vals, key):
    """Deterministic re-implementation of the module's __init__ (JAX RNG)."""
    # TODO(synk): torch.nn.init.normal_'s RNG stream is not reproduced bitwise;
    # the distribution (Normal(mean, std)) and masking are identical.
    T, one = weight_dim[0]
    mask = jnp.zeros((T, one), dtype=jnp.float32)
    mask = mask.at[0:lag, :].set(1.0)
    mean, std = init_vals[0]
    w_1 = mask * (mean + std * jax.random.normal(key, weight_dim[1], dtype=jnp.float32))
    return mask, w_1


if __name__ == "__main__":
    lag = 4
    T = 8
    weight_dim = [(T, 1), (T, 1)]
    init_vals = [(0.0, 0.1)]

    key = jax.random.PRNGKey(0)
    k_w, k_x1, k_x2, k_x3 = jax.random.split(key, 4)
    mask, w_1 = init_params(lag, weight_dim, init_vals, k_w)
    w_eff = mask * w_1

    fwd = jax.jit(fhat2_forward)

    # Case 1: f32, M = 2048 (multiple of 128) -> copy-free view, 2-step grid.
    B, N = 8, 256
    x = jax.random.normal(k_x1, (B, N, T), dtype=jnp.float32)
    out = jax.block_until_ready(fwd(x, mask, w_1))
    ref = 1.0 + jnp.squeeze(x @ w_eff, axis=2)
    assert out.shape == (B, N) and out.dtype == x.dtype
    assert jnp.allclose(out, ref, atol=5e-3, rtol=5e-3), "f32 main case mismatch"

    # Case 2: ragged M = 1200 -> 9 groups (partial final block) + 48-output tail.
    x_r = jax.random.normal(k_x2, (3, 400, T), dtype=jnp.float32)
    out_r = jax.block_until_ready(fwd(x_r, mask, w_1))
    ref_r = 1.0 + jnp.squeeze(x_r @ w_eff, axis=2)
    assert out_r.shape == (3, 400)
    assert jnp.allclose(out_r, ref_r, atol=5e-3, rtol=5e-3), "ragged case mismatch"

    # Case 3: bf16 producer (halves the dominant HBM stream), M = 600 ->
    # 4 groups + 88-output tail, bf16 output dtype.
    x_b = jax.random.normal(k_x3, (3, 200, T), dtype=jnp.float32).astype(jnp.bfloat16)
    out_b = jax.block_until_ready(fwd(x_b, mask, w_1))
    ref_b = 1.0 + jnp.squeeze(x_b.astype(jnp.float32) @ w_eff, axis=2)
    assert out_b.shape == (3, 200) and out_b.dtype == jnp.bfloat16
    assert jnp.allclose(out_b.astype(jnp.float32), ref_b, atol=3e-2, rtol=3e-2), (
        "bf16 case mismatch")

    print("KERNEL_OK")
</pallas_src>

<mosaic_0001>
module attributes {stable_mosaic.version = 11 : i64} {
  func.func @fhat2_kernel(%arg0: i32, %arg1: memref<8x1024xf32, #tpu.memory_space<vmem>>, %arg2: memref<1024x128xf32, #tpu.memory_space<vmem>>, %arg3: memref<8x128xf32, #tpu.memory_space<vmem>>) attributes {dimension_semantics = [#tpu.dimension_semantics<parallel>], iteration_bounds = array<i64: 2>, scalar_prefetch = 0 : i64, scratch_operands = 0 : i64, tpu.core_type = #tpu.core_type<tc>, window_params = [{transform_indices = @transform_0, window_bounds = array<i64: 8, 1024>}, {pipeline_mode = #tpu.pipeline_mode<synchronous>, transform_indices = @transform_1, window_bounds = array<i64: 1024, 128>}, {transform_indices = @transform_2, window_bounds = array<i64: 8, 128>}]} {
    %c0 = arith.constant 0 : index
    %c0_0 = arith.constant 0 : index
    %0 = vector.load %arg1[%c0, %c0_0] : memref<8x1024xf32, #tpu.memory_space<vmem>>, vector<8x1024xf32>
    %c0_1 = arith.constant 0 : index
    %c0_2 = arith.constant 0 : index
    %1 = vector.load %arg2[%c0_1, %c0_2] : memref<1024x128xf32, #tpu.memory_space<vmem>>, vector<1024x128xf32>
    %cst = arith.constant dense<0.000000e+00> : vector<8x128xf32>
    %2 = tpu.matmul %0, %1, %cst {dimension_numbers = #tpu.dot_dimension_numbers<[1], [0], [0], [1], [0, 0, 1, 1], [], []>} : vector<8x1024xf32>, vector<1024x128xf32>, vector<8x128xf32> -> vector<8x128xf32>
    %cst_3 = arith.constant 1.000000e+00 : f32
    %3 = vector.broadcast %cst_3 : f32 to vector<8x128xf32>
    %4 = arith.addf %3, %2 : vector<8x128xf32>
    %c0_4 = arith.constant 0 : index
    %c0_5 = arith.constant 0 : index
    %5 = vector.load %arg3[%c0_4, %c0_5] : memref<8x128xf32, #tpu.memory_space<vmem>>, vector<8x128xf32>
    tpu.vector_store %arg3[%c0_4, %c0_5], %4 {strides = array<i32>} : memref<8x128xf32, #tpu.memory_space<vmem>>, vector<8x128xf32>,
    return
  }
  func.func @transform_0(%arg0: i32) -> (i32, i32) {
    %c0_i32 = arith.constant 0 : i32
    %c0_i32_0 = arith.constant 0 : i32
    return %arg0, %c0_i32 : i32, i32
  }
  func.func @transform_1(%arg0: i32) -> (i32, i32) {
    %c0_i32 = arith.constant 0 : i32
    %c0_i32_0 = arith.constant 0 : i32
    %c0_i32_1 = arith.constant 0 : i32
    return %c0_i32, %c0_i32_0 : i32, i32
  }
  func.func @transform_2(%arg0: i32) -> (i32, i32) {
    %c0_i32 = arith.constant 0 : i32
    %c0_i32_0 = arith.constant 0 : i32
    return %arg0, %c0_i32 : i32, i32
  }
}

</mosaic_0001>

<llo_original>
// kernel: fhat2_forward.1
$region0: #{fhat2_forward.1}
  #allocation0 [shape = 'u32[]', space=smem, size = 0x4, offset = 0x4, fixed_abs, tag = 'smem constant byte address 0x4 - core index']
  #allocation1 [shape = 'u32[144,128]{1,0:T(1,128)}', space=vmem, size = 0x12000, scoped, tag = 'internal scratch']
  %s0 = inlined_call_operand.vmem [shape: f32[16,1024], index: 0, kind: input, shape index: {}]
  %s1 = inlined_call_operand.vmem [shape: f32[1024,128], index: 1, kind: input, shape index: {}]
  %s2 = inlined_call_operand.vmem [shape: f32[16,128], index: 2, kind: output, shape index: {}]
  %s3 = sld [smem:[#allocation0]]
  $region41: #{fhat2_forward.1} parent=0
    _
  %s5 = ssub.s32 1, %s3
  %s6 = scalar_select 0, %s5, %s3
  loop: start=0, step=1, limit=4
  $region2: #{fhat2_forward.1} parent=0 // loop_pre_header
    _
  $region3: #{fhat2_forward.1} parent=0 // loop_header
    %s8 = sphi 0, %s12
    %p9 = scmp.ge.s32.totalorder %s8, 4
    %s18 = sphi 0, %s20
    %s21 = sphi 0, %s18
    %s22 = sphi 0, %s21
    %s38 = sphi 0, %s22
    %s42 = sphi 0, %s42
    %s44 = sphi 0, %s42
    %s45 = sphi 0, %s44
    %s59 = sphi 0, %s45
    %s65 = sphi 0, %s67
    %s68 = sphi 0, %s65
    %s69 = sphi 0, %s68
    %s85 = sphi 0, %s69
  $region4: #{fhat2_forward.1} parent=0 // loop_header_branch
    %11 = sbr.rel (%p9) target = $region8
  $region5: #{fhat2_forward.1} parent=0 // loop_body
    %s13 = ssub.s32 %s8, 1
    %s14 = ssub.s32 %s8, 2
    %s15 = sadd.s32 %s8, 1
    %s16 = ssub.s32 %s8, %s15
    %p17 = scmp.eq.s32.totalorder %s16, 0
    %s19 = sadd.s32 %s18, 1
    %s20 = scalar_select %p17, %s18, %s19
    %p23 = pneg %p17
    %p24 = scmp.eq.s32.totalorder %s8, 1
    %p25 = por %p23, %p24
    %p26 = scmp.ne.s32.totalorder %s18, %s21
    %p27 = scmp.eq.s32.totalorder %s8, 0
    %p28 = por %p26, %p27
    %p29 = scmp.ne.s32.totalorder %s18, %s21
    %p30 = scmp.eq.s32.totalorder %s13, 1
    %p31 = por %p29, %p30
    %p32 = scmp.ne.s32.totalorder %s21, %s22
    %p33 = scmp.eq.s32.totalorder %s13, 0
    %p34 = por %p32, %p33
    %p35 = scmp.ne.s32.totalorder %s21, %s22
    %p36 = scmp.eq.s32.totalorder %s14, 1
    %p37 = por %p35, %p36
    %p39 = scmp.ne.s32.totalorder %s22, %s38
    %p40 = scmp.eq.s32.totalorder %s14, 0
    %p41 = por %p39, %p40
    %s43 = sadd.s32 %s42, 1
    %p46 = scmp.eq.s32.totalorder %s8, 1
    %p47 = scmp.ne.s32.totalorder %s42, %s44
    %p48 = scmp.eq.s32.totalorder %s8, 0
    %p49 = por %p47, %p48
    %p50 = scmp.ne.s32.totalorder %s42, %s44
    %p51 = scmp.eq.s32.totalorder %s13, 1
    %p52 = por %p50, %p51
    %p53 = scmp.ne.s32.totalorder %s44, %s45
    %p54 = scmp.eq.s32.totalorder %s13, 0
    %p55 = por %p53, %p54
    %p56 = scmp.ne.s32.totalorder %s44, %s45
    %p57 = scmp.eq.s32.totalorder %s14, 1
    %p58 = por %p56, %p57
    %p60 = scmp.ne.s32.totalorder %s45, %s59
    %p61 = scmp.eq.s32.totalorder %s14, 0
    %p62 = por %p60, %p61
    %s63 = ssub.s32 %s8, %s15
    %p64 = scmp.eq.s32.totalorder %s63, 0
    %s66 = sadd.s32 %s65, 1
    %s67 = scalar_select %p64, %s65, %s66
    %p70 = pneg %p64
    %p71 = scmp.eq.s32.totalorder %s8, 1
    %p72 = por %p70, %p71
    %p73 = scmp.ne.s32.totalorder %s65, %s68
    %p74 = scmp.eq.s32.totalorder %s8, 0
    %p75 = por %p73, %p74
    %p76 = scmp.ne.s32.totalorder %s65, %s68
    %p77 = scmp.eq.s32.totalorder %s13, 1
    %p78 = por %p76, %p77
    %p79 = scmp.ne.s32.totalorder %s68, %s69
    %p80 = scmp.eq.s32.totalorder %s13, 0
    %p81 = por %p79, %p80
    %p82 = scmp.ne.s32.totalorder %s68, %s69
    %p83 = scmp.eq.s32.totalorder %s14, 1
    %p84 = por %p82, %p83
    %p86 = scmp.ne.s32.totalorder %s69, %s85
    %p87 = scmp.eq.s32.totalorder %s14, 0
    %p88 = por %p86, %p87
    %p89 = scmp.le.s32.totalorder 1, %s8
    %p90 = scmp.lt.s32.totalorder %s8, 3
    %p91 = pnand %p89, %p90
    %p92 = pneg %p91
    // Predicated region
    $region9: #{fhat2_forward.1} parent=5 // pred_check
      _
    $region10: #{fhat2_forward.1} parent=5 // pred_check_branch
      %94 = sbr.rel (%p91) target = $region12
    $region11: #{fhat2_forward.1} parent=5 // pred_region
      %s95 = ssub.s32 %s8, 1
      // Predicated region
      $region13: #{fhat2_forward.1} parent=11 // pred_check
        %p96 = pneg %p55
      $region14: #{fhat2_forward.1} parent=11 // pred_check_branch
        %98 = sbr.rel (%p96) target = $region16
      $region15: #{fhat2_forward.1} parent=11 // pred_region
        _
      $region16: #{fhat2_forward.1} parent=11 // pred_fallthru
        _
    $region12: #{fhat2_forward.1} parent=5 // pred_fallthru
      _
    %p99 = scmp.lt.s32.totalorder %s8, 2
    // Predicated region
    $region17: #{fhat2_forward.1} parent=5 // pred_check
      %p100 = pneg %p99
    $region18: #{fhat2_forward.1} parent=5 // pred_check_branch
      %102 = sbr.rel (%p100) target = $region20
    $region19: #{fhat2_forward.1} parent=5 // pred_region
      // Predicated region
      $region21: #{fhat2_forward.1} parent=19 // pred_check
        %p103 = pneg %p28
      $region22: #{fhat2_forward.1} parent=19 // pred_check_branch
        %105 = sbr.rel (%p103) target = $region24
      $region23: #{fhat2_forward.1} parent=19 // pred_region
        %p106 = scmp.lt.s32.totalorder %s8, 1
        %s107 = scalar_select %p106, %s8, 1
        %s108 = smul.addr %s107, 8
        %s109 = smul.addr %s108, 8
        %s110 = scalar_lea.vmem %s0, %s109
      $region24: #{fhat2_forward.1} parent=19 // pred_fallthru
        _
    $region20: #{fhat2_forward.1} parent=5 // pred_fallthru
      _
    %p111 = scmp.le.s32.totalorder 1, %s8
    %p112 = scmp.lt.s32.totalorder %s8, 3
    %p113 = pnand %p111, %p112
    %p114 = pneg %p113
    // Predicated region
    $region25: #{fhat2_forward.1} parent=5 // pred_check
      _
    $region26: #{fhat2_forward.1} parent=5 // pred_check_branch
      %116 = sbr.rel (%p113) target = $region28
    $region27: #{fhat2_forward.1} parent=5 // pred_region
      %s117 = ssub.s32 %s8, 1
      %p118 = scmp.lt.s32.totalorder %s13, 1
      %s119 = scalar_select %p118, %s13, 1
      %s120 = smul.addr %s119, 8
      %s121 = smul.addr %s120, 8
      %s122 = scalar_lea.vmem %s0, %s121
      %p123 = pneg %p34
      %p124 = pneg %p31
      %p125 = pneg %p55
      %p126 = pneg %p52
      %p127 = pneg %p81
      %p128 = pneg %p78
      %p129 = scmp.lt.s32.totalorder %s13, 1
      %s130 = scalar_select %p129, %s13, 1
      %s131 = smul.addr %s130, 8
      %s132 = scalar_lea.vmem %s2, %s131
      %p133 = scmp.lt.s32.totalorder %s13, 1
      %s134 = scalar_select %p133, %s13, 1
      %s135 = smul.addr %s134, 8
      %s136 = smul.addr %s135, 8
      %s137 = scalar_lea.vmem %s0, %s136
      %p138 = scmp.lt.s32.totalorder %s13, 1
      %s139 = scalar_select %p138, %s13, 1
      %s140 = smul.addr %s139, 8
      %s141 = scalar_lea.vmem %s2, %s140
      %v142 = vld [vmem:[%s137] sm:$0xff]
      %v143 = vld [vmem:[%s137 + $0x8] sm:$0xff]
      %v144 = vld [vmem:[%s137 + $0x10] sm:$0xff]
      %v145 = vld [vmem:[%s137 + $0x18] sm:$0xff]
      %v146 = vld [vmem:[%s137 + $0x20] sm:$0xff]
      %v147 = vld [vmem:[%s137 + $0x28] sm:$0xff]
      %v148 = vld [vmem:[%s137 + $0x30] sm:$0xff]
      %v149 = vld [vmem:[%s137 + $0x38] sm:$0xff]
      %v150 = vld [vmem:[%s1] sm:$0xff]
      %v151 = vld [vmem:[%s1 + $0x8] sm:$0xff]
      %v152 = vld [vmem:[%s1 + $0x10] sm:$0xff]
      %v153 = vld [vmem:[%s1 + $0x18] sm:$0xff]
      %v154 = vld [vmem:[%s1 + $0x20] sm:$0xff]
      %v155 = vld [vmem:[%s1 + $0x28] sm:$0xff]
      %v156 = vld [vmem:[%s1 + $0x30] sm:$0xff]
      %v157 = vld [vmem:[%s1 + $0x38] sm:$0xff]
      %v158 = vld [vmem:[%s1 + $0x40] sm:$0xff]
      %v159 = vld [vmem:[%s1 + $0x48] sm:$0xff]
      %v160 = vld [vmem:[%s1 + $0x50] sm:$0xff]
      %v161 = vld [vmem:[%s1 + $0x58] sm:$0xff]
      %v162 = vld [vmem:[%s1 + $0x60] sm:$0xff]
      %v163 = vld [vmem:[%s1 + $0x68] sm:$0xff]
      %v164 = vld [vmem:[%s1 + $0x70] sm:$0xff]
      %v165 = vld [vmem:[%s1 + $0x78] sm:$0xff]
      %v166 = vld [vmem:[%s1 + $0x80] sm:$0xff]
      %v167 = vld [vmem:[%s1 + $0x88] sm:$0xff]
      %v168 = vld [vmem:[%s1 + $0x90] sm:$0xff]
      %v169 = vld [vmem:[%s1 + $0x98] sm:$0xff]
      %v170 = vld [vmem:[%s1 + $0xa0] sm:$0xff]
      %v171 = vld [vmem:[%s1 + $0xa8] sm:$0xff]
      %v172 = vld [vmem:[%s1 + $0xb0] sm:$0xff]
      %v173 = vld [vmem:[%s1 + $0xb8] sm:$0xff]
      %v174 = vld [vmem:[%s1 + $0xc0] sm:$0xff]
      %v175 = vld [vmem:[%s1 + $0xc8] sm:$0xff]
      %v176 = vld [vmem:[%s1 + $0xd0] sm:$0xff]
      %v177 = vld [vmem:[%s1 + $0xd8] sm:$0xff]
      %v178 = vld [vmem:[%s1 + $0xe0] sm:$0xff]
      %v179 = vld [vmem:[%s1 + $0xe8] sm:$0xff]
      %v180 = vld [vmem:[%s1 + $0xf0] sm:$0xff]
      %v181 = vld [vmem:[%s1 + $0xf8] sm:$0xff]
      %v182 = vld [vmem:[%s1 + $0x100] sm:$0xff]
      %v183 = vld [vmem:[%s1 + $0x108] sm:$0xff]
      %v184 = vld [vmem:[%s1 + $0x110] sm:$0xff]
      %v185 = vld [vmem:[%s1 + $0x118] sm:$0xff]
      %v186 = vld [vmem:[%s1 + $0x120] sm:$0xff]
      %v187 = vld [vmem:[%s1 + $0x128] sm:$0xff]
      %v188 = vld [vmem:[%s1 + $0x130] sm:$0xff]
      %v189 = vld [vmem:[%s1 + $0x138] sm:$0xff]
      %v190 = vld [vmem:[%s1 + $0x140] sm:$0xff]
      %v191 = vld [vmem:[%s1 + $0x148] sm:$0xff]
      %v192 = vld [vmem:[%s1 + $0x150] sm:$0xff]
      %v193 = vld [vmem:[%s1 + $0x158] sm:$0xff]
      %v194 = vld [vmem:[%s1 + $0x160] sm:$0xff]
      %v195 = vld [vmem:[%s1 + $0x168] sm:$0xff]
      %v196 = vld [vmem:[%s1 + $0x170] sm:$0xff]
      %v197 = vld [vmem:[%s1 + $0x178] sm:$0xff]
      %v198 = vld [vmem:[%s1 + $0x180] sm:$0xff]
      %v199 = vld [vmem:[%s1 + $0x188] sm:$0xff]
      %v200 = vld [vmem:[%s1 + $0x190] sm:$0xff]
      %v201 = vld [vmem:[%s1 + $0x198] sm:$0xff]
      %v202 = vld [vmem:[%s1 + $0x1a0] sm:$0xff]
      %v203 = vld [vmem:[%s1 + $0x1a8] sm:$0xff]
      %v204 = vld [vmem:[%s1 + $0x1b0] sm:$0xff]
      %v205 = vld [vmem:[%s1 + $0x1b8] sm:$0xff]
      %v206 = vld [vmem:[%s1 + $0x1c0] sm:$0xff]
      %v207 = vld [vmem:[%s1 + $0x1c8] sm:$0xff]
      %v208 = vld [vmem:[%s1 + $0x1d0] sm:$0xff]
      %v209 = vld [vmem:[%s1 + $0x1d8] sm:$0xff]
      %v210 = vld [vmem:[%s1 + $0x1e0] sm:$0xff]
      %v211 = vld [vmem:[%s1 + $0x1e8] sm:$0xff]
      %v212 = vld [vmem:[%s1 + $0x1f0] sm:$0xff]
      %v213 = vld [vmem:[%s1 + $0x1f8] sm:$0xff]
      %v214 = vld [vmem:[%s1 + $0x200] sm:$0xff]
      %v215 = vld [vmem:[%s1 + $0x208] sm:$0xff]
      %v216 = vld [vmem:[%s1 + $0x210] sm:$0xff]
      %v217 = vld [vmem:[%s1 + $0x218] sm:$0xff]
      %v218 = vld [vmem:[%s1 + $0x220] sm:$0xff]
      %v219 = vld [vmem:[%s1 + $0x228] sm:$0xff]
      %v220 = vld [vmem:[%s1 + $0x230] sm:$0xff]
      %v221 = vld [vmem:[%s1 + $0x238] sm:$0xff]
      %v222 = vld [vmem:[%s1 + $0x240] sm:$0xff]
      %v223 = vld [vmem:[%s1 + $0x248] sm:$0xff]
      %v224 = vld [vmem:[%s1 + $0x250] sm:$0xff]
      %v225 = vld [vmem:[%s1 + $0x258] sm:$0xff]
      %v226 = vld [vmem:[%s1 + $0x260] sm:$0xff]
      %v227 = vld [vmem:[%s1 + $0x268] sm:$0xff]
      %v228 = vld [vmem:[%s1 + $0x270] sm:$0xff]
      %v229 = vld [vmem:[%s1 + $0x278] sm:$0xff]
      %v230 = vld [vmem:[%s1 + $0x280] sm:$0xff]
      %v231 = vld [vmem:[%s1 + $0x288] sm:$0xff]
      %v232 = vld [vmem:[%s1 + $0x290] sm:$0xff]
      %v233 = vld [vmem:[%s1 + $0x298] sm:$0xff]
      %v234 = vld [vmem:[%s1 + $0x2a0] sm:$0xff]
      %v235 = vld [vmem:[%s1 + $0x2a8] sm:$0xff]
      %v236 = vld [vmem:[%s1 + $0x2b0] sm:$0xff]
      %v237 = vld [vmem:[%s1 + $0x2b8] sm:$0xff]
      %v238 = vld [vmem:[%s1 + $0x2c0] sm:$0xff]
      %v239 = vld [vmem:[%s1 + $0x2c8] sm:$0xff]
      %v240 = vld [vmem:[%s1 + $0x2d0] sm:$0xff]
      %v241 = vld [vmem:[%s1 + $0x2d8] sm:$0xff]
      %v242 = vld [vmem:[%s1 + $0x2e0] sm:$0xff]
      %v243 = vld [vmem:[%s1 + $0x2e8] sm:$0xff]
      %v244 = vld [vmem:[%s1 + $0x2f0] sm:$0xff]
      %v245 = vld [vmem:[%s1 + $0x2f8] sm:$0xff]
      %v246 = vld [vmem:[%s1 + $0x300] sm:$0xff]
      %v247 = vld [vmem:[%s1 + $0x308] sm:$0xff]
      %v248 = vld [vmem:[%s1 + $0x310] sm:$0xff]
      %v249 = vld [vmem:[%s1 + $0x318] sm:$0xff]
      %v250 = vld [vmem:[%s1 + $0x320] sm:$0xff]
      %v251 = vld [vmem:[%s1 + $0x328] sm:$0xff]
      %v252 = vld [vmem:[%s1 + $0x330] sm:$0xff]
      %v253 = vld [vmem:[%s1 + $0x338] sm:$0xff]
      %v254 = vld [vmem:[%s1 + $0x340] sm:$0xff]
      %v255 = vld [vmem:[%s1 + $0x348] sm:$0xff]
      %v256 = vld [vmem:[%s1 + $0x350] sm:$0xff]
      %v257 = vld [vmem:[%s1 + $0x358] sm:$0xff]
      %v258 = vld [vmem:[%s1 + $0x360] sm:$0xff]
      %v259 = vld [vmem:[%s1 + $0x368] sm:$0xff]
      %v260 = vld [vmem:[%s1 + $0x370] sm:$0xff]
      %v261 = vld [vmem:[%s1 + $0x378] sm:$0xff]
      %v262 = vld [vmem:[%s1 + $0x380] sm:$0xff]
      %v263 = vld [vmem:[%s1 + $0x388] sm:$0xff]
      %v264 = vld [vmem:[%s1 + $0x390] sm:$0xff]
      %v265 = vld [vmem:[%s1 + $0x398] sm:$0xff]
      %v266 = vld [vmem:[%s1 + $0x3a0] sm:$0xff]
      %v267 = vld [vmem:[%s1 + $0x3a8] sm:$0xff]
      %v268 = vld [vmem:[%s1 + $0x3b0] sm:$0xff]
      %v269 = vld [vmem:[%s1 + $0x3b8] sm:$0xff]
      %v270 = vld [vmem:[%s1 + $0x3c0] sm:$0xff]
      %v271 = vld [vmem:[%s1 + $0x3c8] sm:$0xff]
      %v272 = vld [vmem:[%s1 + $0x3d0] sm:$0xff]
      %v273 = vld [vmem:[%s1 + $0x3d8] sm:$0xff]
      %v274 = vld [vmem:[%s1 + $0x3e0] sm:$0xff]
      %v275 = vld [vmem:[%s1 + $0x3e8] sm:$0xff]
      %v276 = vld [vmem:[%s1 + $0x3f0] sm:$0xff]
      %v277 = vld [vmem:[%s1 + $0x3f8] sm:$0xff]
      %278 = vmatprep.subr.mxu0 0.0
      %279 = vmatpush1.msra.mxu0 %v165
      %280 = vmatprep.subr.mxu0 0.0
      %281 = vmatpush1.msra.mxu0 %v164
      %282 = vmatprep.subr.mxu0 0.0
      %283 = vmatpush1.msra.mxu0 %v163
      %284 = vmatprep.subr.mxu0 0.0
      %285 = vmatpush1.msra.mxu0 %v162
      %286 = vmatprep.subr.mxu0 0.0
      %287 = vmatpush1.msra.mxu0 %v161
      %288 = vmatprep.subr.mxu0 0.0
      %289 = vmatpush1.msra.mxu0 %v160
      %290 = vmatprep.subr.mxu0 0.0
      %291 = vmatpush1.msra.mxu0 %v159
      %292 = vmatprep.subr.mxu0 0.0
      %293 = vmatpush1.msra.mxu0 %v158
      %294 = vmatprep.subr.mxu0 0.0
      %295 = vmatpush1.msra.mxu0 %v157
      %296 = vmatprep.subr.mxu0 0.0
      %297 = vmatpush1.msra.mxu0 %v156
      %298 = vmatprep.subr.mxu0 0.0
      %299 = vmatpush1.msra.mxu0 %v155
      %300 = vmatprep.subr.mxu0 0.0
      %301 = vmatpush1.msra.mxu0 %v154
      %302 = vmatprep.subr.mxu0 0.0
      %303 = vmatpush1.msra.mxu0 %v153
      %304 = vmatprep.subr.mxu0 0.0
      %305 = vmatpush1.msra.mxu0 %v152
      %306 = vmatprep.subr.mxu0 0.0
      %307 = vmatpush1.msra.mxu0 %v151
      %308 = vmatprep.subr.mxu0 0.0
      %309 = vmatpush1.msra.mxu0 %v150
      %310 = vmatprep.subr.mxu0 0.0
      %311 = vmatpush2.msra.mxu0 %v181
      %312 = vmatprep.subr.mxu0 0.0
      %313 = vmatpush2.msra.mxu0 %v180
      %314 = vmatprep.subr.mxu0 0.0
      %315 = vmatpush2.msra.mxu0 %v179
      %316 = vmatprep.subr.mxu0 0.0
      %317 = vmatpush2.msra.mxu0 %v178
      %318 = vmatprep.subr.mxu0 0.0
      %319 = vmatpush2.msra.mxu0 %v177
      %320 = vmatprep.subr.mxu0 0.0
      %321 = vmatpush2.msra.mxu0 %v176
      %322 = vmatprep.subr.mxu0 0.0
      %323 = vmatpush2.msra.mxu0 %v175
      %324 = vmatprep.subr.mxu0 0.0
      %325 = vmatpush2.msra.mxu0 %v174
      %326 = vmatprep.subr.mxu0 0.0
      %327 = vmatpush2.msra.mxu0 %v173
      %328 = vmatprep.subr.mxu0 0.0
      %329 = vmatpush2.msra.mxu0 %v172
      %330 = vmatprep.subr.mxu0 0.0
      %331 = vmatpush2.msra.mxu0 %v171
      %332 = vmatprep.subr.mxu0 0.0
      %333 = vmatpush2.msra.mxu0 %v170
      %334 = vmatprep.subr.mxu0 0.0
      %335 = vmatpush2.msra.mxu0 %v169
      %336 = vmatprep.subr.mxu0 0.0
      %337 = vmatpush2.msra.mxu0 %v168
      %338 = vmatprep.subr.mxu0 0.0
      %339 = vmatpush2.msra.mxu0 %v167
      %340 = vmatprep.subr.mxu0 0.0
      %341 = vmatpush2.msra.mxu0 %v166
      %342 = vmatprep.mubr.f32.mxu0 %v143
      %343 = vmatmul.mubr.f32.gmra.mxu0 %v142
      %v344 = vpop.f32.mrf.mxu0
      %v345 = vadd.f32 1.0, %v344
      %v346 = vpop.f32.mrf.mxu0
      %347 = vdwg.mxu0
      %348 = vmatprep.subr.mxu0 0.0
      %349 = vmatpush1.msra.mxu0 %v197
      %350 = vmatprep.subr.mxu0 0.0
      %351 = vmatpush1.msra.mxu0 %v196
      %352 = vmatprep.subr.mxu0 0.0
      %353 = vmatpush1.msra.mxu0 %v195
      %354 = vmatprep.subr.mxu0 0.0
      %355 = vmatpush1.msra.mxu0 %v194
      %356 = vmatprep.subr.mxu0 0.0
      %357 = vmatpush1.msra.mxu0 %v193
      %358 = vmatprep.subr.mxu0 0.0
      %359 = vmatpush1.msra.mxu0 %v192
      %360 = vmatprep.subr.mxu0 0.0
      %361 = vmatpush1.msra.mxu0 %v191
      %362 = vmatprep.subr.mxu0 0.0
      %363 = vmatpush1.msra.mxu0 %v190
      %364 = vmatprep.subr.mxu0 0.0
      %365 = vmatpush1.msra.mxu0 %v189
      %366 = vmatprep.subr.mxu0 0.0
      %367 = vmatpush1.msra.mxu0 %v188
      %368 = vmatprep.subr.mxu0 0.0
      %369 = vmatpush1.msra.mxu0 %v187
      %370 = vmatprep.subr.mxu0 0.0
      %371 = vmatpush1.msra.mxu0 %v186
      %372 = vmatprep.subr.mxu0 0.0
      %373 = vmatpush1.msra.mxu0 %v185
      %374 = vmatprep.subr.mxu0 0.0
      %375 = vmatpush1.msra.mxu0 %v184
      %376 = vmatprep.subr.mxu0 0.0
      %377 = vmatpush1.msra.mxu0 %v183
      %378 = vmatprep.subr.mxu0 0.0
      %379 = vmatpush1.msra.mxu0 %v182
      %380 = vmatprep.subr.mxu0 0.0
      %381 = vmatpush2.msra.mxu0 %v213
      %382 = vmatprep.subr.mxu0 0.0
      %383 = vmatpush2.msra.mxu0 %v212
      %384 = vmatprep.subr.mxu0 0.0
      %385 = vmatpush2.msra.mxu0 %v211
      %386 = vmatprep.subr.mxu0 0.0
      %387 = vmatpush2.msra.mxu0 %v210
      %388 = vmatprep.subr.mxu0 0.0
      %389 = vmatpush2.msra.mxu0 %v209
      %390 = vmatprep.subr.mxu0 0.0
      %391 = vmatpush2.msra.mxu0 %v208
      %392 = vmatprep.subr.mxu0 0.0
      %393 = vmatpush2.msra.mxu0 %v207
      %394 = vmatprep.subr.mxu0 0.0
      %395 = vmatpush2.msra.mxu0 %v206
      %396 = vmatprep.subr.mxu0 0.0
      %397 = vmatpush2.msra.mxu0 %v205
      %398 = vmatprep.subr.mxu0 0.0
      %399 = vmatpush2.msra.mxu0 %v204
      %400 = vmatprep.subr.mxu0 0.0
      %401 = vmatpush2.msra.mxu0 %v203
      %402 = vmatprep.subr.mxu0 0.0
      %403 = vmatpush2.msra.mxu0 %v202
      %404 = vmatprep.subr.mxu0 0.0
      %405 = vmatpush2.msra.mxu0 %v201
      %406 = vmatprep.subr.mxu0 0.0
      %407 = vmatpush2.msra.mxu0 %v200
      %408 = vmatprep.subr.mxu0 0.0
      %409 = vmatpush2.msra.mxu0 %v199
      %410 = vmatprep.subr.mxu0 0.0
      %411 = vmatpush2.msra.mxu0 %v198
      %412 = vmatprep.mubr.f32.mxu0 %v145
      %413 = vmatmul.mubr.f32.gmra.mxu0 %v144
      %v414 = vpop.f32.mrf.mxu0
      %v415 = vadd.f32 %v345, %v414
      %v416 = vpop.f32.mrf.mxu0
      %417 = vdwg.mxu0
      %418 = vmatprep.subr.mxu0 0.0
      %419 = vmatpush1.msra.mxu0 %v229
      %420 = vmatprep.subr.mxu0 0.0
      %421 = vmatpush1.msra.mxu0 %v228
      %422 = vmatprep.subr.mxu0 0.0
      %423 = vmatpush1.msra.mxu0 %v227
      %424 = vmatprep.subr.mxu0 0.0
      %425 = vmatpush1.msra.mxu0 %v226
      %426 = vmatprep.subr.mxu0 0.0
      %427 = vmatpush1.msra.mxu0 %v225
      %428 = vmatprep.subr.mxu0 0.0
      %429 = vmatpush1.msra.mxu0 %v224
      %430 = vmatprep.subr.mxu0 0.0
      %431 = vmatpush1.msra.mxu0 %v223
      %432 = vmatprep.subr.mxu0 0.0
      %433 = vmatpush1.msra.mxu0 %v222
      %434 = vmatprep.subr.mxu0 0.0
      %435 = vmatpush1.msra.mxu0 %v221
      %436 = vmatprep.subr.mxu0 0.0
      %437 = vmatpush1.msra.mxu0 %v220
      %438 = vmatprep.subr.mxu0 0.0
      %439 = vmatpush1.msra.mxu0 %v219
      %440 = vmatprep.subr.mxu0 0.0
      %441 = vmatpush1.msra.mxu0 %v218
      %442 = vmatprep.subr.mxu0 0.0
      %443 = vmatpush1.msra.mxu0 %v217
      %444 = vmatprep.subr.mxu0 0.0
      %445 = vmatpush1.msra.mxu0 %v216
      %446 = vmatprep.subr.mxu0 0.0
      %447 = vmatpush1.msra.mxu0 %v215
      %448 = vmatprep.subr.mxu0 0.0
      %449 = vmatpush1.msra.mxu0 %v214
      %450 = vmatprep.subr.mxu0 0.0
      %451 = vmatpush2.msra.mxu0 %v245
      %452 = vmatprep.subr.mxu0 0.0
      %453 = vmatpush2.msra.mxu0 %v244
      %454 = vmatprep.subr.mxu0 0.0
      %455 = vmatpush2.msra.mxu0 %v243
      %456 = vmatprep.subr.mxu0 0.0
      %457 = vmatpush2.msra.mxu0 %v242
      %458 = vmatprep.subr.mxu0 0.0
      %459 = vmatpush2.msra.mxu0 %v241
      %460 = vmatprep.subr.mxu0 0.0
      %461 = vmatpush2.msra.mxu0 %v240
      %462 = vmatprep.subr.mxu0 0.0
      %463 = vmatpush2.msra.mxu0 %v239
      %464 = vmatprep.subr.mxu0 0.0
      %465 = vmatpush2.msra.mxu0 %v238
      %466 = vmatprep.subr.mxu0 0.0
      %467 = vmatpush2.msra.mxu0 %v237
      %468 = vmatprep.subr.mxu0 0.0
      %469 = vmatpush2.msra.mxu0 %v236
      %470 = vmatprep.subr.mxu0 0.0
      %471 = vmatpush2.msra.mxu0 %v235
      %472 = vmatprep.subr.mxu0 0.0
      %473 = vmatpush2.msra.mxu0 %v234
      %474 = vmatprep.subr.mxu0 0.0
      %475 = vmatpush2.msra.mxu0 %v233
      %476 = vmatprep.subr.mxu0 0.0
      %477 = vmatpush2.msra.mxu0 %v232
      %478 = vmatprep.subr.mxu0 0.0
      %479 = vmatpush2.msra.mxu0 %v231
      %480 = vmatprep.subr.mxu0 0.0
      %481 = vmatpush2.msra.mxu0 %v230
      %482 = vmatprep.mubr.f32.mxu0 %v147
      %483 = vmatmul.mubr.f32.gmra.mxu0 %v146
      %v484 = vpop.f32.mrf.mxu0
      %v485 = vadd.f32 %v415, %v484
      %v486 = vpop.f32.mrf.mxu0
      %487 = vdwg.mxu0
      %488 = vmatprep.subr.mxu0 0.0
      %489 = vmatpush1.msra.mxu0 %v261
      %490 = vmatprep.subr.mxu0 0.0
      %491 = vmatpush1.msra.mxu0 %v260
      %492 = vmatprep.subr.mxu0 0.0
      %493 = vmatpush1.msra.mxu0 %v259
      %494 = vmatprep.subr.mxu0 0.0
      %495 = vmatpush1.msra.mxu0 %v258
      %496 = vmatprep.subr.mxu0 0.0
      %497 = vmatpush1.msra.mxu0 %v257
      %498 = vmatprep.subr.mxu0 0.0
      %499 = vmatpush1.msra.mxu0 %v256
      %500 = vmatprep.subr.mxu0 0.0
      %501 = vmatpush1.msra.mxu0 %v255
      %502 = vmatprep.subr.mxu0 0.0
      %503 = vmatpush1.msra.mxu0 %v254
      %504 = vmatprep.subr.mxu0 0.0
      %505 = vmatpush1.msra.mxu0 %v253
      %506 = vmatprep.subr.mxu0 0.0
      %507 = vmatpush1.msra.mxu0 %v252
      %508 = vmatprep.subr.mxu0 0.0
      %509 = vmatpush1.msra.mxu0 %v251
      %510 = vmatprep.subr.mxu0 0.0
      %511 = vmatpush1.msra.mxu0 %v250
      %512 = vmatprep.subr.mxu0 0.0
      %513 = vmatpush1.msra.mxu0 %v249
      %514 = vmatprep.subr.mxu0 0.0
      %515 = vmatpush1.msra.mxu0 %v248
      %516 = vmatprep.subr.mxu0 0.0
      %517 = vmatpush1.msra.mxu0 %v247
      %518 = vmatprep.subr.mxu0 0.0
      %519 = vmatpush1.msra.mxu0 %v246
      %520 = vmatprep.subr.mxu0 0.0
      %521 = vmatpush2.msra.mxu0 %v277
      %522 = vmatprep.subr.mxu0 0.0
      %523 = vmatpush2.msra.mxu0 %v276
      %524 = vmatprep.subr.mxu0 0.0
      %525 = vmatpush2.msra.mxu0 %v275
      %526 = vmatprep.subr.mxu0 0.0
      %527 = vmatpush2.msra.mxu0 %v274
      %528 = vmatprep.subr.mxu0 0.0
      %529 = vmatpush2.msra.mxu0 %v273
      %530 = vmatprep.subr.mxu0 0.0
      %531 = vmatpush2.msra.mxu0 %v272
      %532 = vmatprep.subr.mxu0 0.0
      %533 = vmatpush2.msra.mxu0 %v271
      %534 = vmatprep.subr.mxu0 0.0
      %535 = vmatpush2.msra.mxu0 %v270
      %536 = vmatprep.subr.mxu0 0.0
      %537 = vmatpush2.msra.mxu0 %v269
      %538 = vmatprep.subr.mxu0 0.0
      %539 = vmatpush2.msra.mxu0 %v268
      %540 = vmatprep.subr.mxu0 0.0
      %541 = vmatpush2.msra.mxu0 %v267
      %542 = vmatprep.subr.mxu0 0.0
      %543 = vmatpush2.msra.mxu0 %v266
      %544 = vmatprep.subr.mxu0 0.0
      %545 = vmatpush2.msra.mxu0 %v265
      %546 = vmatprep.subr.mxu0 0.0
      %547 = vmatpush2.msra.mxu0 %v264
      %548 = vmatprep.subr.mxu0 0.0
      %549 = vmatpush2.msra.mxu0 %v263
      %550 = vmatprep.subr.mxu0 0.0
      %551 = vmatpush2.msra.mxu0 %v262
      %552 = vmatprep.mubr.f32.mxu0 %v149
      %553 = vmatmul.mubr.f32.gmra.mxu0 %v148
      %v554 = vpop.f32.mrf.mxu0
      %v555 = vadd.f32 %v485, %v554
      %v556 = vpop.f32.mrf.mxu0
      %557 = vdwg.mxu0
      %558 = vst [vmem:[%s141] sm:$0xff] %v555
      %p559 = scmp.lt.s32.totalorder %s13, 1
      %s560 = scalar_select %p559, %s13, 1
      %s561 = smul.addr %s560, 8
      %s562 = scalar_lea.vmem %s2, %s561
      // Predicated region
      $region29: #{fhat2_forward.1} parent=27 // pred_check
        %p563 = pneg %p78
      $region30: #{fhat2_forward.1} parent=27 // pred_check_branch
        %565 = sbr.rel (%p563) target = $region32
      $region31: #{fhat2_forward.1} parent=27 // pred_region
        _
      $region32: #{fhat2_forward.1} parent=27 // pred_fallthru
        _
    $region28: #{fhat2_forward.1} parent=5 // pred_fallthru
      _
    %p566 = scmp.le.s32.totalorder 2, %s8
    // Predicated region
    $region33: #{fhat2_forward.1} parent=5 // pred_check
      %p567 = pneg %p566
    $region34: #{fhat2_forward.1} parent=5 // pred_check_branch
      %569 = sbr.rel (%p567) target = $region36
    $region35: #{fhat2_forward.1} parent=5 // pred_region
      %s570 = ssub.s32 %s8, 2
      // Predicated region
      $region37: #{fhat2_forward.1} parent=35 // pred_check
        %p571 = pneg %p84
      $region38: #{fhat2_forward.1} parent=35 // pred_check_branch
        %573 = sbr.rel (%p571) target = $region40
      $region39: #{fhat2_forward.1} parent=35 // pred_region
        %p574 = scmp.lt.s32.totalorder %s14, 1
        %s575 = scalar_select %p574, %s14, 1
        %s576 = smul.addr %s575, 8
        %s577 = scalar_lea.vmem %s2, %s576
      $region40: #{fhat2_forward.1} parent=35 // pred_fallthru
        _
    $region36: #{fhat2_forward.1} parent=5 // pred_fallthru
      _
  $region6: #{fhat2_forward.1} parent=0 // loop_footer
    %s12 = sadd.s32 1, %s8
  $region7: #{fhat2_forward.1} parent=0 // loop_footer_branch
    %7 = sbr.rel target = $region3
  $region8: #{fhat2_forward.1} parent=0 // loop_exit
    _

</llo_original>
